<compile_context>
chip_gen: v7x
topology: tpu7x:2x2x1
jax: 0.10.0
libtpu: 0.0.40
codegen_flags: <defaults>
</compile_context>

<pallas_src>
import functools

import jax
import jax.numpy as jnp
from jax.experimental import pallas as pl
from jax.experimental.pallas import tpu as pltpu


def attention_kernel(x_ref, w1_ref, b1_ref, w2_ref, o_ref, *, fused_transpose):
    """One grid step processes TB batch elements.

    x_ref : (TB, S, D_in)  f32
    w1_ref: (D_in, D_hid)  bf16  (pre-cast once in the wrapper)
    b1_ref: (1, D_hid)     f32
    w2_ref: (D_hid, H)     bf16  (pre-cast once in the wrapper)
    o_ref : (TB, H, S) if fused_transpose else (TB, S, H), f32
    """
    TB, S, D_in = x_ref.shape
    H = w2_ref.shape[-1]

    # ---- fc1 + tanh: one fused (TB*S, D_in) @ (D_in, D_hid) MXU matmul ------
    # S is a multiple of 8 here, so merging (TB, S) is a cheap sublane-
    # contiguous reshape.  bf16 operands, f32 accumulation.
    x2d = x_ref[...].reshape(TB * S, D_in).astype(jnp.bfloat16)
    h = jnp.tanh(
        jnp.dot(x2d, w1_ref[...], preferred_element_type=jnp.float32)
        + b1_ref[...]
    )                                                          # (TB*S, D_hid) f32

    # ---- fc2 (no bias: b2 is constant along the softmax axis -> cancels) ----
    logits = jnp.dot(
        h.astype(jnp.bfloat16), w2_ref[...], preferred_element_type=jnp.float32
    ).reshape(TB, S, H)                                        # (TB, S, H) f32

    # ---- softmax over the sequence axis (axis=1), f32 math -------------------
    m = jnp.max(logits, axis=1, keepdims=True)                 # (TB, 1, H)
    e = jnp.exp(logits - m)                                    # (TB, S, H)
    s = jnp.sum(e, axis=1, keepdims=True)                      # (TB, 1, H)
    p = e * pl.reciprocal(s, approx=True)                      # EUP reciprocal

    if fused_transpose:
        # (S, H) -> (H, S) minor-dims transpose on the XLU (idle here); the
        # store then follows the natural last dim of the (B, H, S) output.
        o_ref[...] = jnp.swapaxes(p, 1, 2).astype(o_ref.dtype)
    else:
        o_ref[...] = p.astype(o_ref.dtype)


def _device_kind():
    try:
        return jax.devices()[0].device_kind.lower()
    except Exception:
        return ""


def _pick_batch_tile(B, S, D_in, D_hid, H, *, keep_two_steps, vmem_budget_bytes):
    """Largest batch tile whose per-step working set fits the VMEM budget."""
    per_b = 4 * (
        2 * S * D_in      # x tile, double-buffered, f32
        + 2 * H * S       # out tile, double-buffered, f32
        + 2 * S * D_hid   # fc1 activations (f32 + bf16 copy)
        + 3 * S * H       # logits / exp / softmax temporaries, f32
    )
    tb = int(max(1, min(B, vmem_budget_bytes // max(per_b, 1))))
    if keep_two_steps and B > 1:
        # v7x: keep >= 2 grid steps so both TensorCores get work.
        tb = min(tb, max(1, B // 2))
    # Keep the grid exact.  TODO(synk): pad/mask a ragged last batch tile
    # instead of shrinking tb when B is prime/odd.
    while B % tb:
        tb -= 1
    return tb


def _run(x, w1_bf16, b1_2d, w2_bf16, *, tb, vmem_limit, fused_transpose,
         single_buffer_weights):
    B, S, D_in = x.shape
    D_hid = w1_bf16.shape[1]
    H = w2_bf16.shape[1]

    # Grid-invariant operands: single-buffer them when supported.
    wkw = {"pipeline_mode": pl.Buffered(1)} if single_buffer_weights else {}

    if fused_transpose:
        out_shape = jax.ShapeDtypeStruct((B, H, S), x.dtype)
        out_spec = pl.BlockSpec((tb, H, S), lambda b: (b, 0, 0))
    else:
        out_shape = jax.ShapeDtypeStruct((B, S, H), x.dtype)
        out_spec = pl.BlockSpec((tb, S, H), lambda b: (b, 0, 0))

    out = pl.pallas_call(
        functools.partial(attention_kernel, fused_transpose=fused_transpose),
        out_shape=out_shape,
        grid_spec=pltpu.PrefetchScalarGridSpec(
            num_scalar_prefetch=0,
            grid=(B // tb,),
            in_specs=[
                pl.BlockSpec((tb, S, D_in), lambda b: (b, 0, 0)),       # x tile
                pl.BlockSpec((D_in, D_hid), lambda b: (0, 0), **wkw),   # w1
                pl.BlockSpec((1, D_hid), lambda b: (0, 0), **wkw),      # b1
                pl.BlockSpec((D_hid, H), lambda b: (0, 0), **wkw),      # w2
            ],
            out_specs=out_spec,
        ),
        compiler_params=pltpu.CompilerParams(
            dimension_semantics=("parallel",),
            vmem_limit_bytes=vmem_limit,
        ),
    )(x, w1_bf16, b1_2d, w2_bf16)

    if not fused_transpose:
        out = jnp.transpose(out, (0, 2, 1))
    return out


# Ordered most- to least-optimized; the first configuration that compiles and
# runs is used (graceful degradation if a feature is unsupported by the
# installed Pallas/Mosaic).
_CONFIGS = (
    dict(fused_transpose=True, single_buffer_weights=True),
    dict(fused_transpose=True, single_buffer_weights=False),
    dict(fused_transpose=False, single_buffer_weights=False),
)


def attention_forward(x, w1, b1, w2, b2=None):
    """x: (B, S, D_in) -> (B, H, S).

    b2 is accepted for API parity with the PyTorch module but is unused: it is
    constant along the softmax (S) axis, so it cancels exactly in the softmax.
    """
    del b2
    B, S, D_in = x.shape
    D_hid = w1.shape[1]
    H = w2.shape[1]

    kind = _device_kind()
    is_v7x = ("v7" in kind) or ("7x" in kind)
    # v7x: 64 MiB physical VMEM -> keep the scoped limit at 32 MiB.
    # v5e/v6e: 128 MiB physical -> raise the scoped limit to 64 MiB.
    vmem_limit = (32 if is_v7x else 64) * 1024 * 1024
    tb = _pick_batch_tile(
        B, S, D_in, D_hid, H,
        keep_two_steps=is_v7x,
        vmem_budget_bytes=vmem_limit // 2,   # headroom for weights/compiler use
    )

    # Hoisted, one-time bf16 cast of the grid-invariant matmul operands.
    w1_bf16 = w1.astype(jnp.bfloat16)
    w2_bf16 = w2.astype(jnp.bfloat16)
    b1_2d = b1.reshape(1, D_hid)             # stays f32 (added post-accumulation)

    last_err = None
    for cfg in _CONFIGS:
        try:
            return _run(x, w1_bf16, b1_2d, w2_bf16, tb=tb,
                        vmem_limit=vmem_limit, **cfg)
        except Exception as err:  # unsupported feature -> try the next config
            last_err = err
    raise last_err


def reference_forward(x, w1, b1, w2, b2):
    """Pure-JAX f32 reference matching the PyTorch module semantics."""
    h = jnp.tanh(jnp.einsum("bsd,dk->bsk", x, w1) + b1)        # (B, S, D_hid)
    logits = jnp.einsum("bsk,kh->bsh", h, w2) + b2             # (B, S, H)
    p = jax.nn.softmax(logits, axis=1)                         # softmax over seq
    return jnp.transpose(p, (0, 2, 1))                         # (B, H, S)


if __name__ == "__main__":
    # Small deterministic shapes consistent with the module's forward.
    B, S = 2, 8
    input_dim, dense_dim, n_heads = 32, 16, 4

    key = jax.random.PRNGKey(0)
    kx, kw1, kb1, kw2, kb2 = jax.random.split(key, 5)

    x = jax.random.normal(kx, (B, S, input_dim), dtype=jnp.float32)

    # PyTorch Linear stores weight as (out, in); generate already-transposed
    # (in, out) weights so the kernel computes x @ W (same math as x @ W^T).
    w1 = jax.random.normal(kw1, (input_dim, dense_dim), dtype=jnp.float32) * 0.1
    b1 = jax.random.normal(kb1, (dense_dim,), dtype=jnp.float32) * 0.1
    w2 = jax.random.normal(kw2, (dense_dim, n_heads), dtype=jnp.float32) * 0.1
    b2 = jax.random.normal(kb2, (n_heads,), dtype=jnp.float32) * 0.1

    out = attention_forward(x, w1, b1, w2, b2)
    out = jax.block_until_ready(out)

    ref = reference_forward(x, w1, b1, w2, b2)
    assert out.shape == (B, n_heads, S), out.shape
    # Tolerance covers bf16 matmul operands (f32 accumulation) and the
    # approximate EUP reciprocal; softmax outputs are bounded in [0, 1].
    assert jnp.allclose(out, ref, atol=1e-2, rtol=1e-2), "mismatch vs reference"

    print("KERNEL_OK")
</pallas_src>

<mosaic_0001>
module attributes {stable_mosaic.version = 11 : i64} {
  func.func @attention_kernel(%arg0: i32, %arg1: memref<2x8x32xf32, #tpu.memory_space<vmem>>, %arg2: memref<32x16xbf16, #tpu.memory_space<vmem>>, %arg3: memref<1x16xf32, #tpu.memory_space<vmem>>, %arg4: memref<16x4xbf16, #tpu.memory_space<vmem>>, %arg5: memref<2x4x8xf32, #tpu.memory_space<vmem>>) attributes {dimension_semantics = [#tpu.dimension_semantics<parallel>], iteration_bounds = array<i64: 1>, scalar_prefetch = 0 : i64, scratch_operands = 0 : i64, tpu.core_type = #tpu.core_type<tc>, window_params = [{transform_indices = @transform_0, window_bounds = array<i64: 2, 8, 32>}, {pipeline_mode = #tpu.pipeline_mode<synchronous>, transform_indices = @transform_1, window_bounds = array<i64: 32, 16>}, {pipeline_mode = #tpu.pipeline_mode<synchronous>, transform_indices = @transform_2, window_bounds = array<i64: 1, 16>}, {pipeline_mode = #tpu.pipeline_mode<synchronous>, transform_indices = @transform_3, window_bounds = array<i64: 16, 4>}, {transform_indices = @transform_4, window_bounds = array<i64: 2, 4, 8>}]} {
    %c0 = arith.constant 0 : index
    %c0_0 = arith.constant 0 : index
    %c0_1 = arith.constant 0 : index
    %0 = vector.load %arg1[%c0, %c0_0, %c0_1] : memref<2x8x32xf32, #tpu.memory_space<vmem>>, vector<2x8x32xf32>
    %1 = vector.shape_cast %0 : vector<2x8x32xf32> to vector<16x32xf32>
    %2 = arith.truncf %1 : vector<16x32xf32> to vector<16x32xbf16>
    %c0_2 = arith.constant 0 : index
    %c0_3 = arith.constant 0 : index
    %3 = vector.load %arg2[%c0_2, %c0_3] : memref<32x16xbf16, #tpu.memory_space<vmem>>, vector<32x16xbf16>
    %cst = arith.constant dense<0.000000e+00> : vector<16x16xf32>
    %4 = tpu.matmul %2, %3, %cst {dimension_numbers = #tpu.dot_dimension_numbers<[1], [0], [0], [1], [0, 0, 1, 1], [], []>} : vector<16x32xbf16>, vector<32x16xbf16>, vector<16x16xf32> -> vector<16x16xf32>
    %c0_4 = arith.constant 0 : index
    %c0_5 = arith.constant 0 : index
    %5 = vector.load %arg3[%c0_4, %c0_5] : memref<1x16xf32, #tpu.memory_space<vmem>>, vector<1x16xf32>
    %6 = vector.broadcast %5 : vector<1x16xf32> to vector<16x16xf32>
    %7 = arith.addf %4, %6 : vector<16x16xf32>
    %8 = math.tanh %7 : vector<16x16xf32>
    %9 = arith.truncf %8 : vector<16x16xf32> to vector<16x16xbf16>
    %c0_6 = arith.constant 0 : index
    %c0_7 = arith.constant 0 : index
    %10 = vector.load %arg4[%c0_6, %c0_7] : memref<16x4xbf16, #tpu.memory_space<vmem>>, vector<16x4xbf16>
    %cst_8 = arith.constant dense<0.000000e+00> : vector<16x4xf32>
    %11 = tpu.matmul %9, %10, %cst_8 {dimension_numbers = #tpu.dot_dimension_numbers<[1], [0], [0], [1], [0, 0, 1, 1], [], []>} : vector<16x16xbf16>, vector<16x4xbf16>, vector<16x4xf32> -> vector<16x4xf32>
    %12 = vector.shape_cast %11 : vector<16x4xf32> to vector<2x8x4xf32>
    %cst_9 = arith.constant dense<0xFF800000> : vector<2x4xf32>
    %13 = vector.multi_reduction <maximumf>, %12, %cst_9 [1] : vector<2x8x4xf32> to vector<2x4xf32>
    %14 = vector.shape_cast %13 : vector<2x4xf32> to vector<2x1x4xf32>
    %15 = vector.broadcast %14 : vector<2x1x4xf32> to vector<2x8x4xf32>
    %16 = arith.subf %12, %15 : vector<2x8x4xf32>
    %17 = math.exp %16 : vector<2x8x4xf32>
    %cst_10 = arith.constant dense<0.000000e+00> : vector<2x4xf32>
    %18 = vector.multi_reduction <add>, %17, %cst_10 [1] : vector<2x8x4xf32> to vector<2x4xf32>
    %19 = vector.shape_cast %18 : vector<2x4xf32> to vector<2x1x4xf32>
    %20 = tpu.reciprocal %19 {approx = true} : vector<2x1x4xf32> -> vector<2x1x4xf32>
    %21 = vector.broadcast %20 : vector<2x1x4xf32> to vector<2x8x4xf32>
    %22 = arith.mulf %17, %21 : vector<2x8x4xf32>
    %23 = tpu.transpose %22, [0, 2, 1] : vector<2x8x4xf32> -> vector<2x4x8xf32>
    %c0_11 = arith.constant 0 : index
    %c0_12 = arith.constant 0 : index
    %c0_13 = arith.constant 0 : index
    %24 = vector.load %arg5[%c0_11, %c0_12, %c0_13] : memref<2x4x8xf32, #tpu.memory_space<vmem>>, vector<2x4x8xf32>
    tpu.vector_store %arg5[%c0_11, %c0_12, %c0_13], %23 {strides = array<i32>} : memref<2x4x8xf32, #tpu.memory_space<vmem>>, vector<2x4x8xf32>,
    return
  }
  func.func @transform_0(%arg0: i32) -> (i32, i32, i32) {
    %c0_i32 = arith.constant 0 : i32
    %c0_i32_0 = arith.constant 0 : i32
    %c0_i32_1 = arith.constant 0 : i32
    return %arg0, %c0_i32, %c0_i32_0 : i32, i32, i32
  }
  func.func @transform_1(%arg0: i32) -> (i32, i32) {
    %c0_i32 = arith.constant 0 : i32
    %c0_i32_0 = arith.constant 0 : i32
    %c0_i32_1 = arith.constant 0 : i32
    return %c0_i32, %c0_i32_0 : i32, i32
  }
  func.func @transform_2(%arg0: i32) -> (i32, i32) {
    %c0_i32 = arith.constant 0 : i32
    %c0_i32_0 = arith.constant 0 : i32
    %c0_i32_1 = arith.constant 0 : i32
    return %c0_i32, %c0_i32_0 : i32, i32
  }
  func.func @transform_3(%arg0: i32) -> (i32, i32) {
    %c0_i32 = arith.constant 0 : i32
    %c0_i32_0 = arith.constant 0 : i32
    %c0_i32_1 = arith.constant 0 : i32
    return %c0_i32, %c0_i32_0 : i32, i32
  }
  func.func @transform_4(%arg0: i32) -> (i32, i32, i32) {
    %c0_i32 = arith.constant 0 : i32
    %c0_i32_0 = arith.constant 0 : i32
    %c0_i32_1 = arith.constant 0 : i32
    return %arg0, %c0_i32, %c0_i32_0 : i32, i32, i32
  }
}

module attributes {stable_mosaic.version = 11 : i64} {
  func.func @attention_kernel(%arg0: i32, %arg1: memref<2x8x32xf32, #tpu.memory_space<vmem>>, %arg2: memref<32x16xbf16, #tpu.memory_space<vmem>>, %arg3: memref<1x16xf32, #tpu.memory_space<vmem>>, %arg4: memref<16x4xbf16, #tpu.memory_space<vmem>>, %arg5: memref<2x4x8xf32, #tpu.memory_space<vmem>>) attributes {dimension_semantics = [#tpu.dimension_semantics<parallel>], iteration_bounds = array<i64: 1>, scalar_prefetch = 0 : i64, scratch_operands = 0 : i64, tpu.core_type = #tpu.core_type<tc>, window_params = [{transform_indices = @transform_0, window_bounds = array<i64: 2, 8, 32>}, {pipeline_mode = #tpu.pipeline_mode<synchronous>, transform_indices = @transform_1, window_bounds = array<i64: 32, 16>}, {pipeline_mode = #tpu.pipeline_mode<synchronous>, transform_indices = @transform_2, window_bounds = array<i64: 1, 16>}, {pipeline_mode = #tpu.pipeline_mode<synchronous>, transform_indices = @transform_3, window_bounds = array<i64: 16, 4>}, {transform_indices = @transform_4, window_bounds = array<i64: 2, 4, 8>}]} {
    %c0 = arith.constant 0 : index
    %c0_0 = arith.constant 0 : index
    %c0_1 = arith.constant 0 : index
    %0 = vector.load %arg1[%c0, %c0_0, %c0_1] : memref<2x8x32xf32, #tpu.memory_space<vmem>>, vector<2x8x32xf32>
    %1 = vector.shape_cast %0 : vector<2x8x32xf32> to vector<16x32xf32>
    %2 = arith.truncf %1 : vector<16x32xf32> to vector<16x32xbf16>
    %c0_2 = arith.constant 0 : index
    %c0_3 = arith.constant 0 : index
    %3 = vector.load %arg2[%c0_2, %c0_3] : memref<32x16xbf16, #tpu.memory_space<vmem>>, vector<32x16xbf16>
    %cst = arith.constant dense<0.000000e+00> : vector<16x16xf32>
    %4 = tpu.matmul %2, %3, %cst {dimension_numbers = #tpu.dot_dimension_numbers<[1], [0], [0], [1], [0, 0, 1, 1], [], []>} : vector<16x32xbf16>, vector<32x16xbf16>, vector<16x16xf32> -> vector<16x16xf32>
    %c0_4 = arith.constant 0 : index
    %c0_5 = arith.constant 0 : index
    %5 = vector.load %arg3[%c0_4, %c0_5] : memref<1x16xf32, #tpu.memory_space<vmem>>, vector<1x16xf32>
    %6 = vector.broadcast %5 : vector<1x16xf32> to vector<16x16xf32>
    %7 = arith.addf %4, %6 : vector<16x16xf32>
    %8 = math.tanh %7 : vector<16x16xf32>
    %9 = arith.truncf %8 : vector<16x16xf32> to vector<16x16xbf16>
    %c0_6 = arith.constant 0 : index
    %c0_7 = arith.constant 0 : index
    %10 = vector.load %arg4[%c0_6, %c0_7] : memref<16x4xbf16, #tpu.memory_space<vmem>>, vector<16x4xbf16>
    %cst_8 = arith.constant dense<0.000000e+00> : vector<16x4xf32>
    %11 = tpu.matmul %9, %10, %cst_8 {dimension_numbers = #tpu.dot_dimension_numbers<[1], [0], [0], [1], [0, 0, 1, 1], [], []>} : vector<16x16xbf16>, vector<16x4xbf16>, vector<16x4xf32> -> vector<16x4xf32>
    %12 = vector.shape_cast %11 : vector<16x4xf32> to vector<2x8x4xf32>
    %cst_9 = arith.constant dense<0xFF800000> : vector<2x4xf32>
    %13 = vector.multi_reduction <maximumf>, %12, %cst_9 [1] : vector<2x8x4xf32> to vector<2x4xf32>
    %14 = vector.shape_cast %13 : vector<2x4xf32> to vector<2x1x4xf32>
    %15 = vector.broadcast %14 : vector<2x1x4xf32> to vector<2x8x4xf32>
    %16 = arith.subf %12, %15 : vector<2x8x4xf32>
    %17 = math.exp %16 : vector<2x8x4xf32>
    %cst_10 = arith.constant dense<0.000000e+00> : vector<2x4xf32>
    %18 = vector.multi_reduction <add>, %17, %cst_10 [1] : vector<2x8x4xf32> to vector<2x4xf32>
    %19 = vector.shape_cast %18 : vector<2x4xf32> to vector<2x1x4xf32>
    %20 = tpu.reciprocal %19 {approx = true} : vector<2x1x4xf32> -> vector<2x1x4xf32>
    %21 = vector.broadcast %20 : vector<2x1x4xf32> to vector<2x8x4xf32>
    %22 = arith.mulf %17, %21 : vector<2x8x4xf32>
    %23 = tpu.transpose %22, [0, 2, 1] : vector<2x8x4xf32> -> vector<2x4x8xf32>
    %c0_11 = arith.constant 0 : index
    %c0_12 = arith.constant 0 : index
    %c0_13 = arith.constant 0 : index
    %24 = vector.load %arg5[%c0_11, %c0_12, %c0_13] : memref<2x4x8xf32, #tpu.memory_space<vmem>>, vector<2x4x8xf32>
    tpu.vector_store %arg5[%c0_11, %c0_12, %c0_13], %23 {strides = array<i32>} : memref<2x4x8xf32, #tpu.memory_space<vmem>>, vector<2x4x8xf32>,
    return
  }
  func.func @transform_0(%arg0: i32) -> (i32, i32, i32) {
    %c0_i32 = arith.constant 0 : i32
    %c0_i32_0 = arith.constant 0 : i32
    %c0_i32_1 = arith.constant 0 : i32
    return %arg0, %c0_i32, %c0_i32_0 : i32, i32, i32
  }
  func.func @transform_1(%arg0: i32) -> (i32, i32) {
    %c0_i32 = arith.constant 0 : i32
    %c0_i32_0 = arith.constant 0 : i32
    %c0_i32_1 = arith.constant 0 : i32
    return %c0_i32, %c0_i32_0 : i32, i32
  }
  func.func @transform_2(%arg0: i32) -> (i32, i32) {
    %c0_i32 = arith.constant 0 : i32
    %c0_i32_0 = arith.constant 0 : i32
    %c0_i32_1 = arith.constant 0 : i32
    return %c0_i32, %c0_i32_0 : i32, i32
  }
  func.func @transform_3(%arg0: i32) -> (i32, i32) {
    %c0_i32 = arith.constant 0 : i32
    %c0_i32_0 = arith.constant 0 : i32
    %c0_i32_1 = arith.constant 0 : i32
    return %c0_i32, %c0_i32_0 : i32, i32
  }
  func.func @transform_4(%arg0: i32) -> (i32, i32, i32) {
    %c0_i32 = arith.constant 0 : i32
    %c0_i32_0 = arith.constant 0 : i32
    %c0_i32_1 = arith.constant 0 : i32
    return %arg0, %c0_i32, %c0_i32_0 : i32, i32, i32
  }
}

module attributes {stable_mosaic.version = 11 : i64} {
  func.func @attention_kernel(%arg0: i32, %arg1: memref<2x8x32xf32, #tpu.memory_space<vmem>>, %arg2: memref<32x16xbf16, #tpu.memory_space<vmem>>, %arg3: memref<1x16xf32, #tpu.memory_space<vmem>>, %arg4: memref<16x4xbf16, #tpu.memory_space<vmem>>, %arg5: memref<2x8x4xf32, #tpu.memory_space<vmem>>) attributes {dimension_semantics = [#tpu.dimension_semantics<parallel>], iteration_bounds = array<i64: 1>, scalar_prefetch = 0 : i64, scratch_operands = 0 : i64, tpu.core_type = #tpu.core_type<tc>, window_params = [{transform_indices = @transform_0, window_bounds = array<i64: 2, 8, 32>}, {pipeline_mode = #tpu.pipeline_mode<synchronous>, transform_indices = @transform_1, window_bounds = array<i64: 32, 16>}, {pipeline_mode = #tpu.pipeline_mode<synchronous>, transform_indices = @transform_2, window_bounds = array<i64: 1, 16>}, {pipeline_mode = #tpu.pipeline_mode<synchronous>, transform_indices = @transform_3, window_bounds = array<i64: 16, 4>}, {transform_indices = @transform_4, window_bounds = array<i64: 2, 8, 4>}]} {
    %c0 = arith.constant 0 : index
    %c0_0 = arith.constant 0 : index
    %c0_1 = arith.constant 0 : index
    %0 = vector.load %arg1[%c0, %c0_0, %c0_1] : memref<2x8x32xf32, #tpu.memory_space<vmem>>, vector<2x8x32xf32>
    %1 = vector.shape_cast %0 : vector<2x8x32xf32> to vector<16x32xf32>
    %2 = arith.truncf %1 : vector<16x32xf32> to vector<16x32xbf16>
    %c0_2 = arith.constant 0 : index
    %c0_3 = arith.constant 0 : index
    %3 = vector.load %arg2[%c0_2, %c0_3] : memref<32x16xbf16, #tpu.memory_space<vmem>>, vector<32x16xbf16>
    %cst = arith.constant dense<0.000000e+00> : vector<16x16xf32>
    %4 = tpu.matmul %2, %3, %cst {dimension_numbers = #tpu.dot_dimension_numbers<[1], [0], [0], [1], [0, 0, 1, 1], [], []>} : vector<16x32xbf16>, vector<32x16xbf16>, vector<16x16xf32> -> vector<16x16xf32>
    %c0_4 = arith.constant 0 : index
    %c0_5 = arith.constant 0 : index
    %5 = vector.load %arg3[%c0_4, %c0_5] : memref<1x16xf32, #tpu.memory_space<vmem>>, vector<1x16xf32>
    %6 = vector.broadcast %5 : vector<1x16xf32> to vector<16x16xf32>
    %7 = arith.addf %4, %6 : vector<16x16xf32>
    %8 = math.tanh %7 : vector<16x16xf32>
    %9 = arith.truncf %8 : vector<16x16xf32> to vector<16x16xbf16>
    %c0_6 = arith.constant 0 : index
    %c0_7 = arith.constant 0 : index
    %10 = vector.load %arg4[%c0_6, %c0_7] : memref<16x4xbf16, #tpu.memory_space<vmem>>, vector<16x4xbf16>
    %cst_8 = arith.constant dense<0.000000e+00> : vector<16x4xf32>
    %11 = tpu.matmul %9, %10, %cst_8 {dimension_numbers = #tpu.dot_dimension_numbers<[1], [0], [0], [1], [0, 0, 1, 1], [], []>} : vector<16x16xbf16>, vector<16x4xbf16>, vector<16x4xf32> -> vector<16x4xf32>
    %12 = vector.shape_cast %11 : vector<16x4xf32> to vector<2x8x4xf32>
    %cst_9 = arith.constant dense<0xFF800000> : vector<2x4xf32>
    %13 = vector.multi_reduction <maximumf>, %12, %cst_9 [1] : vector<2x8x4xf32> to vector<2x4xf32>
    %14 = vector.shape_cast %13 : vector<2x4xf32> to vector<2x1x4xf32>
    %15 = vector.broadcast %14 : vector<2x1x4xf32> to vector<2x8x4xf32>
    %16 = arith.subf %12, %15 : vector<2x8x4xf32>
    %17 = math.exp %16 : vector<2x8x4xf32>
    %cst_10 = arith.constant dense<0.000000e+00> : vector<2x4xf32>
    %18 = vector.multi_reduction <add>, %17, %cst_10 [1] : vector<2x8x4xf32> to vector<2x4xf32>
    %19 = vector.shape_cast %18 : vector<2x4xf32> to vector<2x1x4xf32>
    %20 = tpu.reciprocal %19 {approx = true} : vector<2x1x4xf32> -> vector<2x1x4xf32>
    %21 = vector.broadcast %20 : vector<2x1x4xf32> to vector<2x8x4xf32>
    %22 = arith.mulf %17, %21 : vector<2x8x4xf32>
    %c0_11 = arith.constant 0 : index
    %c0_12 = arith.constant 0 : index
    %c0_13 = arith.constant 0 : index
    %23 = vector.load %arg5[%c0_11, %c0_12, %c0_13] : memref<2x8x4xf32, #tpu.memory_space<vmem>>, vector<2x8x4xf32>
    tpu.vector_store %arg5[%c0_11, %c0_12, %c0_13], %22 {strides = array<i32>} : memref<2x8x4xf32, #tpu.memory_space<vmem>>, vector<2x8x4xf32>,
    return
  }
  func.func @transform_0(%arg0: i32) -> (i32, i32, i32) {
    %c0_i32 = arith.constant 0 : i32
    %c0_i32_0 = arith.constant 0 : i32
    %c0_i32_1 = arith.constant 0 : i32
    return %arg0, %c0_i32, %c0_i32_0 : i32, i32, i32
  }
  func.func @transform_1(%arg0: i32) -> (i32, i32) {
    %c0_i32 = arith.constant 0 : i32
    %c0_i32_0 = arith.constant 0 : i32
    %c0_i32_1 = arith.constant 0 : i32
    return %c0_i32, %c0_i32_0 : i32, i32
  }
  func.func @transform_2(%arg0: i32) -> (i32, i32) {
    %c0_i32 = arith.constant 0 : i32
    %c0_i32_0 = arith.constant 0 : i32
    %c0_i32_1 = arith.constant 0 : i32
    return %c0_i32, %c0_i32_0 : i32, i32
  }
  func.func @transform_3(%arg0: i32) -> (i32, i32) {
    %c0_i32 = arith.constant 0 : i32
    %c0_i32_0 = arith.constant 0 : i32
    %c0_i32_1 = arith.constant 0 : i32
    return %c0_i32, %c0_i32_0 : i32, i32
  }
  func.func @transform_4(%arg0: i32) -> (i32, i32, i32) {
    %c0_i32 = arith.constant 0 : i32
    %c0_i32_0 = arith.constant 0 : i32
    %c0_i32_1 = arith.constant 0 : i32
    return %arg0, %c0_i32, %c0_i32_0 : i32, i32, i32
  }
}

</mosaic_0001>

<llo_original>
// kernel: tpu_custom_call.1
$region0: #{tpu_custom_call.1}
  #allocation0 [shape = 'u32[]', space=smem, size = 0x4, offset = 0x4, fixed_abs, tag = 'smem constant byte address 0x4 - core index']
  #allocation1 [shape = 'u32[144,128]{1,0:T(1,128)}', space=vmem, size = 0x12000, scoped, tag = 'internal scratch']
  %s0 = inlined_call_operand.hbm [shape: f32[2,8,32], index: 0, kind: input, shape index: {}]
  %s1 = inlined_call_operand.hbm [shape: bf16[32,16], index: 1, kind: input, shape index: {}]
  %s2 = inlined_call_operand.hbm [shape: f32[1,16], index: 2, kind: input, shape index: {}]
  %s3 = inlined_call_operand.hbm [shape: bf16[16,4], index: 3, kind: input, shape index: {}]
  %s4 = inlined_call_operand.hbm [shape: f32[2,4,8], index: 4, kind: output, shape index: {}]
  %s5 = sld [smem:[#allocation0]]
  $region42: #{tpu_custom_call.1} parent=0
    _
  %s7 = ssub.s32 1, %s5
  %s8 = scalar_select 0, %s7, %s5
  $region1: #{tpu_custom_call.1} parent=0
    #allocation2 [shape = 'u8[8192]{0}', space=vmem, size = 0x2000, scoped, tag = 'input window, operand 0, single buffered']
    #allocation3 [shape = 's32[1]{0}', space=sflag, size = 0x4, scoped, tag = 'scoped memory for tpu_custom_call.1']
    #allocation4 [shape = 's32[1]{0}', space=sflag, size = 0x4, scoped, tag = 'scoped memory for tpu_custom_call.1']
    #allocation5 [shape = 'u8[8192]{0}', space=vmem, size = 0x2000, scoped, tag = 'input window, operand 1, single buffered']
    #allocation6 [shape = 's32[1]{0}', space=sflag, size = 0x4, scoped, tag = 'scoped memory for tpu_custom_call.1']
    #allocation7 [shape = 'u8[512]{0}', space=vmem, size = 0x400, scoped, tag = 'input window, operand 2, single buffered']
    #allocation8 [shape = 'u8[4096]{0}', space=vmem, size = 0x1000, scoped, tag = 'input window, operand 3, single buffered']
    #allocation9 [shape = 's32[1]{0}', space=sflag, size = 0x4, scoped, tag = 'scoped memory for tpu_custom_call.1']
    #allocation10 [shape = 'u8[4096]{0}', space=vmem, size = 0x1000, scoped, tag = 'output window, operand 0, single buffered']
    %9 = vsyncpa [#allocation3], 0
    %10 = vsyncpa [#allocation6], 0
    %11 = vsyncpa [#allocation9], 0
    %12 = vsyncpa [#allocation4], 0
    // Predicated region
    $region2: #{tpu_custom_call.1} parent=1 // pred_check
      _
    $region3: #{tpu_custom_call.1} parent=1 // pred_check_branch
      %14 = sbr.rel (0) target = $region5
    $region4: #{tpu_custom_call.1} parent=1 // pred_region
      %s16 = ssub.s32 256, 256
      %17 = vsyncadd [#allocation3], %s16
      %s18 = sshll.u32 [#allocation2], 4
      %s19 = int_to_ptr.vmem [resolvable:$true] %s18
      %24 = dma.hbm_to_vmem [thread:$0]  %s0, 256, %s19, [#allocation3], 128, 128, 8
    $region5: #{tpu_custom_call.1} parent=1 // pred_fallthru
      _
    // Predicated region
    $region6: #{tpu_custom_call.1} parent=1 // pred_check
      _
    $region7: #{tpu_custom_call.1} parent=1 // pred_check_branch
      %26 = sbr.rel (0) target = $region9
    $region8: #{tpu_custom_call.1} parent=1 // pred_region
      %s28 = ssub.s32 256, 256
      %29 = vsyncadd [#allocation6], %s28
      %s30 = sshll.u32 [#allocation5], 4
      %s31 = int_to_ptr.vmem [resolvable:$true] %s30
      %36 = dma.hbm_to_vmem [thread:$0]  %s1, 256, %s31, [#allocation6], 64, 64, 4
    $region9: #{tpu_custom_call.1} parent=1 // pred_fallthru
      _
    // Predicated region
    $region10: #{tpu_custom_call.1} parent=1 // pred_check
      _
    $region11: #{tpu_custom_call.1} parent=1 // pred_check_branch
      %38 = sbr.rel (0) target = $region13
    $region12: #{tpu_custom_call.1} parent=1 // pred_region
      %s40 = ssub.s32 16, 16
      %41 = vsyncadd [#allocation6], %s40
      %s43 = sshll.u32 [#allocation7], 4
      %s44 = int_to_ptr.vmem [resolvable:$true] %s43
      %46 = dma.hbm_to_vmem [thread:$0]  %s2, 16, %s44, [#allocation6]
    $region13: #{tpu_custom_call.1} parent=1 // pred_fallthru
      _
    // Predicated region
    $region14: #{tpu_custom_call.1} parent=1 // pred_check
      _
    $region15: #{tpu_custom_call.1} parent=1 // pred_check_branch
      %48 = sbr.rel (0) target = $region17
    $region16: #{tpu_custom_call.1} parent=1 // pred_region
      %s50 = ssub.s32 128, 128
      %51 = vsyncadd [#allocation9], %s50
      %s52 = sshll.u32 [#allocation8], 4
      %s53 = int_to_ptr.vmem [resolvable:$true] %s52
      %58 = dma.hbm_to_vmem [thread:$0]  %s3, 128, %s53, [#allocation9], 64, 64, 4
    $region17: #{tpu_custom_call.1} parent=1 // pred_fallthru
      _
    // Predicated region
    $region18: #{tpu_custom_call.1} parent=1 // pred_check
      _
    $region19: #{tpu_custom_call.1} parent=1 // pred_check_branch
      %60 = sbr.rel (0) target = $region21
    $region20: #{tpu_custom_call.1} parent=1 // pred_region
      %61 = dma.done [#allocation3], 256
    $region21: #{tpu_custom_call.1} parent=1 // pred_fallthru
      _
    // Predicated region
    $region22: #{tpu_custom_call.1} parent=1 // pred_check
      _
    $region23: #{tpu_custom_call.1} parent=1 // pred_check_branch
      %63 = sbr.rel (0) target = $region25
    $region24: #{tpu_custom_call.1} parent=1 // pred_region
      %64 = dma.done [#allocation6], 256
    $region25: #{tpu_custom_call.1} parent=1 // pred_fallthru
      _
    // Predicated region
    $region26: #{tpu_custom_call.1} parent=1 // pred_check
      _
    $region27: #{tpu_custom_call.1} parent=1 // pred_check_branch
      %66 = sbr.rel (0) target = $region29
    $region28: #{tpu_custom_call.1} parent=1 // pred_region
      %67 = dma.done [#allocation6], 16
    $region29: #{tpu_custom_call.1} parent=1 // pred_fallthru
      _
    // Predicated region
    $region30: #{tpu_custom_call.1} parent=1 // pred_check
      _
    $region31: #{tpu_custom_call.1} parent=1 // pred_check_branch
      %69 = sbr.rel (0) target = $region33
    $region32: #{tpu_custom_call.1} parent=1 // pred_region
      %70 = dma.done [#allocation9], 128
    $region33: #{tpu_custom_call.1} parent=1 // pred_fallthru
      _
    %v72 = vld [vmem:[#allocation2] sm:$0xff]
    %v73 = vld [vmem:[#allocation2 + $0x8] sm:$0xff]
    %v74 = vpack.c.bf16 %v73, %v72
    %v75 = vld [vmem:[#allocation5] sm:$0xf]
    %v76 = vld [vmem:[#allocation5 + $0x4] sm:$0xf]
    %v77 = vld [vmem:[#allocation5 + $0x8] sm:$0xf]
    %v78 = vld [vmem:[#allocation5 + $0xc] sm:$0xf]
    %v79 = vld [vmem:[#allocation7] sm:$0x1]
    %v81 = vlaneseq
    %v82 = vshrl.u32 %v81, 7
    %v83 = vsub.s32 0, %v82
    %v84 = vrot.slane %v79, %v83
    %v90 = vunpack.c.l.b16 %v75
    %v91 = vunpack.c.l.b16 %v76
    %v92 = vunpack.c.l.b16 %v77
    %v93 = vunpack.c.l.b16 %v78
    %v94 = vpack.c.b16 %v91, %v90
    %v95 = vpack.c.b16 %v93, %v92
    %vm98 = vcmask 261120
    %v100 = vsel %vm98, %v74, 0
    %102 = vmatprep.subr.bf16.mxu0 0
    %103 = vmatpush1.bf16.msra.mxu0 %v94
    %104 = vmatprep.subr.bf16.mxu0 0
    %105 = vmatpush1.bf16.msra.mxu0 %v95
    %106 = vmatprep.subr.bf16.mxu0 0
    %107 = vmatpush1.bf16.msra.mxu0 0
    %108 = vmatprep.subr.bf16.mxu0 0
    %109 = vmatpush1.bf16.msra.mxu0 0
    %110 = vmatprep.subr.bf16.mxu0 0
    %111 = vmatpush1.bf16.msra.mxu0 0
    %112 = vmatprep.subr.bf16.mxu0 0
    %113 = vmatpush1.bf16.msra.mxu0 0
    %114 = vmatprep.subr.bf16.mxu0 0
    %115 = vmatpush1.bf16.msra.mxu0 0
    %116 = vmatprep.subr.bf16.mxu0 0
    %117 = vmatpush1.bf16.msra.mxu0 0
    %118 = vmatprep.subr.bf16.mxu0 0
    %119 = vmatpush1.bf16.msra.mxu0 0
    %120 = vmatprep.subr.bf16.mxu0 0
    %121 = vmatpush1.bf16.msra.mxu0 0
    %122 = vmatprep.subr.bf16.mxu0 0
    %123 = vmatpush1.bf16.msra.mxu0 0
    %124 = vmatprep.subr.bf16.mxu0 0
    %125 = vmatpush1.bf16.msra.mxu0 0
    %126 = vmatprep.subr.bf16.mxu0 0
    %127 = vmatpush1.bf16.msra.mxu0 0
    %128 = vmatprep.subr.bf16.mxu0 0
    %129 = vmatpush1.bf16.msra.mxu0 0
    %130 = vmatprep.subr.bf16.mxu0 0
    %131 = vmatpush1.bf16.msra.mxu0 0
    %132 = vmatprep.subr.bf16.mxu0 0
    %133 = vmatpush1.bf16.msra.mxu0 0
    %134 = vmatprep.mubr.bf16.mxu0 0
    %135 = vmatmul.mubr.bf16.gmra.mrb[0].mxu0 %v100
    %v136 = vpop.f32.mrb[0].mxu0
    %v137 = vadd.f32 %v84, %v136
    %v138 = vpop.f32.mrb[0].mxu0
    %v139 = vpop.f32.mrb[0].mxu0
    %v140 = vadd.f32 %v84, %v139
    %v141 = vpop.f32.mrb[0].mxu0
    %142 = vdwg.mxu0
    %v143 = vtanh.pop %v137
    %v144 = vtanh.pop %v140
    %v145 = vpack.c.bf16 %v144, %v143
    %v146 = vld [vmem:[#allocation8] sm:$0xf]
    %v147 = vld [vmem:[#allocation8 + $0x4] sm:$0xf]
    %v150 = vunpack.c.l.b16 %v146
    %v151 = vunpack.c.l.b16 %v147
    %v152 = vpack.c.b16 %v151, %v150
    %vm154 = vcmask 130048
    %v156 = vsel %vm154, %v145, 0
    %158 = vmatprep.subr.bf16.mxu0 0
    %159 = vmatpush1.bf16.msra.mxu0 %v152
    %160 = vmatprep.subr.bf16.mxu0 0
    %161 = vmatpush1.bf16.msra.mxu0 0
    %162 = vmatprep.subr.bf16.mxu0 0
    %163 = vmatpush1.bf16.msra.mxu0 0
    %164 = vmatprep.subr.bf16.mxu0 0
    %165 = vmatpush1.bf16.msra.mxu0 0
    %166 = vmatprep.subr.bf16.mxu0 0
    %167 = vmatpush1.bf16.msra.mxu0 0
    %168 = vmatprep.subr.bf16.mxu0 0
    %169 = vmatpush1.bf16.msra.mxu0 0
    %170 = vmatprep.subr.bf16.mxu0 0
    %171 = vmatpush1.bf16.msra.mxu0 0
    %172 = vmatprep.subr.bf16.mxu0 0
    %173 = vmatpush1.bf16.msra.mxu0 0
    %174 = vmatprep.subr.bf16.mxu0 0
    %175 = vmatpush1.bf16.msra.mxu0 0
    %176 = vmatprep.subr.bf16.mxu0 0
    %177 = vmatpush1.bf16.msra.mxu0 0
    %178 = vmatprep.subr.bf16.mxu0 0
    %179 = vmatpush1.bf16.msra.mxu0 0
    %180 = vmatprep.subr.bf16.mxu0 0
    %181 = vmatpush1.bf16.msra.mxu0 0
    %182 = vmatprep.subr.bf16.mxu0 0
    %183 = vmatpush1.bf16.msra.mxu0 0
    %184 = vmatprep.subr.bf16.mxu0 0
    %185 = vmatpush1.bf16.msra.mxu0 0
    %186 = vmatprep.subr.bf16.mxu0 0
    %187 = vmatpush1.bf16.msra.mxu0 0
    %188 = vmatprep.subr.bf16.mxu0 0
    %189 = vmatpush1.bf16.msra.mxu0 0
    %190 = vmatprep.mubr.bf16.mxu0 0
    %191 = vmatmul.mubr.bf16.gmra.mrb[0].mxu0 %v156
    %v192 = vpop.f32.mrb[0].mxu0
    %v193 = vadd.f32 0.0, %v192
    %v194 = vpop.f32.mrb[0].mxu0
    %v195 = vpop.f32.mrb[0].mxu0
    %v196 = vadd.f32 0.0, %v195
    %v197 = vpop.f32.mrb[0].mxu0
    %198 = vdwg.mxu0
    %vm199 = vcmask 31744
    %v200 = vsel %vm199, %v193, -inf
    %v201 = vrot.slane %v200, 4
    %v202 = vmax.f32 %v200, %v201
    %v203 = vrot.slane %v202, 2
    %v204 = vmax.f32 %v202, %v203
    %v205 = vrot.slane %v204, 1
    %v206 = vmax.f32 %v204, %v205
    %v207 = vsel %vm199, %v196, -inf
    %v208 = vrot.slane %v207, 4
    %v209 = vmax.f32 %v207, %v208
    %v210 = vrot.slane %v209, 2
    %v211 = vmax.f32 %v209, %v210
    %v212 = vrot.slane %v211, 1
    %v213 = vmax.f32 %v211, %v212
    %v214 = vsub.f32 %v193, %v206
    %v215 = vsub.f32 %v196, %v213
    %v216 = vmul.f32 %v214, 1.442695
    %v217 = vpow.pop %v216
    %v218 = vmul.f32 %v215, 1.442695
    %v219 = vpow.pop %v218
    %v220 = vsel %vm199, %v217, 0.0
    %v221 = vrot.slane %v220, 4
    %v222 = vadd.f32 %v220, %v221
    %v223 = vrot.slane %v222, 2
    %v224 = vadd.f32 %v222, %v223
    %v225 = vrot.slane %v224, 1
    %v226 = vadd.f32 %v224, %v225
    %v227 = vsel %vm199, %v219, 0.0
    %v228 = vrot.slane %v227, 4
    %v229 = vadd.f32 %v227, %v228
    %v230 = vrot.slane %v229, 2
    %v231 = vadd.f32 %v229, %v230
    %v232 = vrot.slane %v231, 1
    %v233 = vadd.f32 %v231, %v232
    %v234 = vrcp.pop %v226
    %v235 = vrcp.pop %v233
    %v236 = vmul.f32 %v217, %v234
    %v237 = vmul.f32 %v219, %v235
    %238 = vxpose.xlu0.b32.start [1/16] %v236, 128
    %239 = vxpose.xlu0.b32.cont [2/16] 0.0, 128
    %240 = vxpose.xlu0.b32.cont [3/16] 0.0, 128
    %241 = vxpose.xlu0.b32.cont [4/16] 0.0, 128
    %242 = vxpose.xlu0.b32.cont [5/16] 0.0, 128
    %243 = vxpose.xlu0.b32.cont [6/16] 0.0, 128
    %244 = vxpose.xlu0.b32.cont [7/16] 0.0, 128
    %245 = vxpose.xlu0.b32.cont [8/16] 0.0, 128
    %246 = vxpose.xlu0.b32.cont [9/16] 0.0, 128
    %247 = vxpose.xlu0.b32.cont [10/16] 0.0, 128
    %248 = vxpose.xlu0.b32.cont [11/16] 0.0, 128
    %249 = vxpose.xlu0.b32.cont [12/16] 0.0, 128
    %250 = vxpose.xlu0.b32.cont [13/16] 0.0, 128
    %251 = vxpose.xlu0.b32.cont [14/16] 0.0, 128
    %252 = vxpose.xlu0.b32.cont [15/16] 0.0, 128
    %253 = vxpose.xlu0.b32.end [16/16] 0.0, 128
    %v254 = vpop.trf.xlu0
    %v255 = vpop.trf.xlu0
    %v256 = vpop.trf.xlu0
    %v257 = vpop.trf.xlu0
    %v258 = vpop.trf.xlu0
    %v259 = vpop.trf.xlu0
    %v260 = vpop.trf.xlu0
    %v261 = vpop.trf.xlu0
    %v262 = vpop.trf.xlu0
    %v263 = vpop.trf.xlu0
    %v264 = vpop.trf.xlu0
    %v265 = vpop.trf.xlu0
    %v266 = vpop.trf.xlu0
    %v267 = vpop.trf.xlu0
    %v268 = vpop.trf.xlu0
    %v269 = vpop.trf.xlu0
    %270 = vxpose.xlu0.b32.start [1/16] %v237, 128
    %271 = vxpose.xlu0.b32.cont [2/16] 0.0, 128
    %272 = vxpose.xlu0.b32.cont [3/16] 0.0, 128
    %273 = vxpose.xlu0.b32.cont [4/16] 0.0, 128
    %274 = vxpose.xlu0.b32.cont [5/16] 0.0, 128
    %275 = vxpose.xlu0.b32.cont [6/16] 0.0, 128
    %276 = vxpose.xlu0.b32.cont [7/16] 0.0, 128
    %277 = vxpose.xlu0.b32.cont [8/16] 0.0, 128
    %278 = vxpose.xlu0.b32.cont [9/16] 0.0, 128
    %279 = vxpose.xlu0.b32.cont [10/16] 0.0, 128
    %280 = vxpose.xlu0.b32.cont [11/16] 0.0, 128
    %281 = vxpose.xlu0.b32.cont [12/16] 0.0, 128
    %282 = vxpose.xlu0.b32.cont [13/16] 0.0, 128
    %283 = vxpose.xlu0.b32.cont [14/16] 0.0, 128
    %284 = vxpose.xlu0.b32.cont [15/16] 0.0, 128
    %285 = vxpose.xlu0.b32.end [16/16] 0.0, 128
    %v286 = vpop.trf.xlu0
    %v287 = vpop.trf.xlu0
    %v288 = vpop.trf.xlu0
    %v289 = vpop.trf.xlu0
    %v290 = vpop.trf.xlu0
    %v291 = vpop.trf.xlu0
    %v292 = vpop.trf.xlu0
    %v293 = vpop.trf.xlu0
    %v294 = vpop.trf.xlu0
    %v295 = vpop.trf.xlu0
    %v296 = vpop.trf.xlu0
    %v297 = vpop.trf.xlu0
    %v298 = vpop.trf.xlu0
    %v299 = vpop.trf.xlu0
    %v300 = vpop.trf.xlu0
    %v301 = vpop.trf.xlu0
    %vm302 = vcmask 60416
    %303 = vst.msk [vmem:[#allocation10] sm:$0xf] %vm302, %v254
    %304 = vst.msk [vmem:[#allocation10 + $0x4] sm:$0xf] %vm302, %v286
    // Predicated region
    $region34: #{tpu_custom_call.1} parent=1 // pred_check
      _
    $region35: #{tpu_custom_call.1} parent=1 // pred_check_branch
      %306 = sbr.rel (0) target = $region37
    $region36: #{tpu_custom_call.1} parent=1 // pred_region
      %s308 = ssub.s32 128, 128
      %309 = vsyncadd [#allocation4], %s308
      %s310 = sshll.u32 [#allocation10], 4
      %s311 = int_to_ptr.vmem [resolvable:$true] %s310
      %316 = dma.vmem_to_hbm [thread:$0]  %s311, 128, %s4, [#allocation4], 64, 64, 4
    $region37: #{tpu_custom_call.1} parent=1 // pred_fallthru
      _
    // Predicated region
    $region38: #{tpu_custom_call.1} parent=1 // pred_check
      _
    $region39: #{tpu_custom_call.1} parent=1 // pred_check_branch
      %318 = sbr.rel (0) target = $region41
    $region40: #{tpu_custom_call.1} parent=1 // pred_region
      %319 = dma.done [#allocation4], 128
    $region41: #{tpu_custom_call.1} parent=1 // pred_fallthru
      _
    %320 = vsyncpa [#allocation3], 1
    %321 = vsyncpa [#allocation6], 1
    %322 = vsyncpa [#allocation9], 1
    %323 = vsyncpa [#allocation4], 1

// kernel: tpu_custom_call.1
$region0: #{tpu_custom_call.1}
  #allocation0 [shape = 'u32[]', space=smem, size = 0x4, offset = 0x4, fixed_abs, tag = 'smem constant byte address 0x4 - core index']
  #allocation1 [shape = 'u32[144,128]{1,0:T(1,128)}', space=vmem, size = 0x12000, scoped, tag = 'internal scratch']
  %s0 = inlined_call_operand.hbm [shape: f32[2,8,32], index: 0, kind: input, shape index: {}]
  %s1 = inlined_call_operand.hbm [shape: bf16[32,16], index: 1, kind: input, shape index: {}]
  %s2 = inlined_call_operand.hbm [shape: f32[1,16], index: 2, kind: input, shape index: {}]
  %s3 = inlined_call_operand.hbm [shape: bf16[16,4], index: 3, kind: input, shape index: {}]
  %s4 = inlined_call_operand.hbm [shape: f32[2,4,8], index: 4, kind: output, shape index: {}]
  %s5 = sld [smem:[#allocation0]]
  $region42: #{tpu_custom_call.1} parent=0
    _
  %s7 = ssub.s32 1, %s5
  %s8 = scalar_select 0, %s7, %s5
  $region1: #{tpu_custom_call.1} parent=0
    #allocation2 [shape = 'u8[8192]{0}', space=vmem, size = 0x2000, scoped, tag = 'input window, operand 0, single buffered']
    #allocation3 [shape = 's32[1]{0}', space=sflag, size = 0x4, scoped, tag = 'scoped memory for tpu_custom_call.1']
    #allocation4 [shape = 's32[1]{0}', space=sflag, size = 0x4, scoped, tag = 'scoped memory for tpu_custom_call.1']
    #allocation5 [shape = 'u8[8192]{0}', space=vmem, size = 0x2000, scoped, tag = 'input window, operand 1, single buffered']
    #allocation6 [shape = 's32[1]{0}', space=sflag, size = 0x4, scoped, tag = 'scoped memory for tpu_custom_call.1']
    #allocation7 [shape = 'u8[512]{0}', space=vmem, size = 0x400, scoped, tag = 'input window, operand 2, single buffered']
    #allocation8 [shape = 'u8[4096]{0}', space=vmem, size = 0x1000, scoped, tag = 'input window, operand 3, single buffered']
    #allocation9 [shape = 's32[1]{0}', space=sflag, size = 0x4, scoped, tag = 'scoped memory for tpu_custom_call.1']
    #allocation10 [shape = 'u8[4096]{0}', space=vmem, size = 0x1000, scoped, tag = 'output window, operand 0, single buffered']
    %9 = vsyncpa [#allocation3], 0
    %10 = vsyncpa [#allocation6], 0
    %11 = vsyncpa [#allocation9], 0
    %12 = vsyncpa [#allocation4], 0
    // Predicated region
    $region2: #{tpu_custom_call.1} parent=1 // pred_check
      _
    $region3: #{tpu_custom_call.1} parent=1 // pred_check_branch
      %14 = sbr.rel (0) target = $region5
    $region4: #{tpu_custom_call.1} parent=1 // pred_region
      %s16 = ssub.s32 256, 256
      %17 = vsyncadd [#allocation3], %s16
      %s18 = sshll.u32 [#allocation2], 4
      %s19 = int_to_ptr.vmem [resolvable:$true] %s18
      %24 = dma.hbm_to_vmem [thread:$0]  %s0, 256, %s19, [#allocation3], 128, 128, 8
    $region5: #{tpu_custom_call.1} parent=1 // pred_fallthru
      _
    // Predicated region
    $region6: #{tpu_custom_call.1} parent=1 // pred_check
      _
    $region7: #{tpu_custom_call.1} parent=1 // pred_check_branch
      %26 = sbr.rel (0) target = $region9
    $region8: #{tpu_custom_call.1} parent=1 // pred_region
      %s28 = ssub.s32 256, 256
      %29 = vsyncadd [#allocation6], %s28
      %s30 = sshll.u32 [#allocation5], 4
      %s31 = int_to_ptr.vmem [resolvable:$true] %s30
      %36 = dma.hbm_to_vmem [thread:$0]  %s1, 256, %s31, [#allocation6], 64, 64, 4
    $region9: #{tpu_custom_call.1} parent=1 // pred_fallthru
      _
    // Predicated region
    $region10: #{tpu_custom_call.1} parent=1 // pred_check
      _
    $region11: #{tpu_custom_call.1} parent=1 // pred_check_branch
      %38 = sbr.rel (0) target = $region13
    $region12: #{tpu_custom_call.1} parent=1 // pred_region
      %s40 = ssub.s32 16, 16
      %41 = vsyncadd [#allocation6], %s40
      %s43 = sshll.u32 [#allocation7], 4
      %s44 = int_to_ptr.vmem [resolvable:$true] %s43
      %46 = dma.hbm_to_vmem [thread:$0]  %s2, 16, %s44, [#allocation6]
    $region13: #{tpu_custom_call.1} parent=1 // pred_fallthru
      _
    // Predicated region
    $region14: #{tpu_custom_call.1} parent=1 // pred_check
      _
    $region15: #{tpu_custom_call.1} parent=1 // pred_check_branch
      %48 = sbr.rel (0) target = $region17
    $region16: #{tpu_custom_call.1} parent=1 // pred_region
      %s50 = ssub.s32 128, 128
      %51 = vsyncadd [#allocation9], %s50
      %s52 = sshll.u32 [#allocation8], 4
      %s53 = int_to_ptr.vmem [resolvable:$true] %s52
      %58 = dma.hbm_to_vmem [thread:$0]  %s3, 128, %s53, [#allocation9], 64, 64, 4
    $region17: #{tpu_custom_call.1} parent=1 // pred_fallthru
      _
    // Predicated region
    $region18: #{tpu_custom_call.1} parent=1 // pred_check
      _
    $region19: #{tpu_custom_call.1} parent=1 // pred_check_branch
      %60 = sbr.rel (0) target = $region21
    $region20: #{tpu_custom_call.1} parent=1 // pred_region
      %61 = dma.done [#allocation3], 256
    $region21: #{tpu_custom_call.1} parent=1 // pred_fallthru
      _
    // Predicated region
    $region22: #{tpu_custom_call.1} parent=1 // pred_check
      _
    $region23: #{tpu_custom_call.1} parent=1 // pred_check_branch
      %63 = sbr.rel (0) target = $region25
    $region24: #{tpu_custom_call.1} parent=1 // pred_region
      %64 = dma.done [#allocation6], 256
    $region25: #{tpu_custom_call.1} parent=1 // pred_fallthru
      _
    // Predicated region
    $region26: #{tpu_custom_call.1} parent=1 // pred_check
      _
    $region27: #{tpu_custom_call.1} parent=1 // pred_check_branch
      %66 = sbr.rel (0) target = $region29
    $region28: #{tpu_custom_call.1} parent=1 // pred_region
      %67 = dma.done [#allocation6], 16
    $region29: #{tpu_custom_call.1} parent=1 // pred_fallthru
      _
    // Predicated region
    $region30: #{tpu_custom_call.1} parent=1 // pred_check
      _
    $region31: #{tpu_custom_call.1} parent=1 // pred_check_branch
      %69 = sbr.rel (0) target = $region33
    $region32: #{tpu_custom_call.1} parent=1 // pred_region
      %70 = dma.done [#allocation9], 128
    $region33: #{tpu_custom_call.1} parent=1 // pred_fallthru
      _
    %v72 = vld [vmem:[#allocation2] sm:$0xff]
    %v73 = vld [vmem:[#allocation2 + $0x8] sm:$0xff]
    %v74 = vpack.c.bf16 %v73, %v72
    %v75 = vld [vmem:[#allocation5] sm:$0xf]
    %v76 = vld [vmem:[#allocation5 + $0x4] sm:$0xf]
    %v77 = vld [vmem:[#allocation5 + $0x8] sm:$0xf]
    %v78 = vld [vmem:[#allocation5 + $0xc] sm:$0xf]
    %v79 = vld [vmem:[#allocation7] sm:$0x1]
    %v81 = vlaneseq
    %v82 = vshrl.u32 %v81, 7
    %v83 = vsub.s32 0, %v82
    %v84 = vrot.slane %v79, %v83
    %v90 = vunpack.c.l.b16 %v75
    %v91 = vunpack.c.l.b16 %v76
    %v92 = vunpack.c.l.b16 %v77
    %v93 = vunpack.c.l.b16 %v78
    %v94 = vpack.c.b16 %v91, %v90
    %v95 = vpack.c.b16 %v93, %v92
    %vm98 = vcmask 261120
    %v100 = vsel %vm98, %v74, 0
    %102 = vmatprep.subr.bf16.mxu0 0
    %103 = vmatpush1.bf16.msra.mxu0 %v94
    %104 = vmatprep.subr.bf16.mxu0 0
    %105 = vmatpush1.bf16.msra.mxu0 %v95
    %106 = vmatprep.subr.bf16.mxu0 0
    %107 = vmatpush1.bf16.msra.mxu0 0
    %108 = vmatprep.subr.bf16.mxu0 0
    %109 = vmatpush1.bf16.msra.mxu0 0
    %110 = vmatprep.subr.bf16.mxu0 0
    %111 = vmatpush1.bf16.msra.mxu0 0
    %112 = vmatprep.subr.bf16.mxu0 0
    %113 = vmatpush1.bf16.msra.mxu0 0
    %114 = vmatprep.subr.bf16.mxu0 0
    %115 = vmatpush1.bf16.msra.mxu0 0
    %116 = vmatprep.subr.bf16.mxu0 0
    %117 = vmatpush1.bf16.msra.mxu0 0
    %118 = vmatprep.subr.bf16.mxu0 0
    %119 = vmatpush1.bf16.msra.mxu0 0
    %120 = vmatprep.subr.bf16.mxu0 0
    %121 = vmatpush1.bf16.msra.mxu0 0
    %122 = vmatprep.subr.bf16.mxu0 0
    %123 = vmatpush1.bf16.msra.mxu0 0
    %124 = vmatprep.subr.bf16.mxu0 0
    %125 = vmatpush1.bf16.msra.mxu0 0
    %126 = vmatprep.subr.bf16.mxu0 0
    %127 = vmatpush1.bf16.msra.mxu0 0
    %128 = vmatprep.subr.bf16.mxu0 0
    %129 = vmatpush1.bf16.msra.mxu0 0
    %130 = vmatprep.subr.bf16.mxu0 0
    %131 = vmatpush1.bf16.msra.mxu0 0
    %132 = vmatprep.subr.bf16.mxu0 0
    %133 = vmatpush1.bf16.msra.mxu0 0
    %134 = vmatprep.mubr.bf16.mxu0 0
    %135 = vmatmul.mubr.bf16.gmra.mrb[0].mxu0 %v100
    %v136 = vpop.f32.mrb[0].mxu0
    %v137 = vadd.f32 %v84, %v136
    %v138 = vpop.f32.mrb[0].mxu0
    %v139 = vpop.f32.mrb[0].mxu0
    %v140 = vadd.f32 %v84, %v139
    %v141 = vpop.f32.mrb[0].mxu0
    %142 = vdwg.mxu0
    %v143 = vtanh.pop %v137
    %v144 = vtanh.pop %v140
    %v145 = vpack.c.bf16 %v144, %v143
    %v146 = vld [vmem:[#allocation8] sm:$0xf]
    %v147 = vld [vmem:[#allocation8 + $0x4] sm:$0xf]
    %v150 = vunpack.c.l.b16 %v146
    %v151 = vunpack.c.l.b16 %v147
    %v152 = vpack.c.b16 %v151, %v150
    %vm154 = vcmask 130048
    %v156 = vsel %vm154, %v145, 0
    %158 = vmatprep.subr.bf16.mxu0 0
    %159 = vmatpush1.bf16.msra.mxu0 %v152
    %160 = vmatprep.subr.bf16.mxu0 0
    %161 = vmatpush1.bf16.msra.mxu0 0
    %162 = vmatprep.subr.bf16.mxu0 0
    %163 = vmatpush1.bf16.msra.mxu0 0
    %164 = vmatprep.subr.bf16.mxu0 0
    %165 = vmatpush1.bf16.msra.mxu0 0
    %166 = vmatprep.subr.bf16.mxu0 0
    %167 = vmatpush1.bf16.msra.mxu0 0
    %168 = vmatprep.subr.bf16.mxu0 0
    %169 = vmatpush1.bf16.msra.mxu0 0
    %170 = vmatprep.subr.bf16.mxu0 0
    %171 = vmatpush1.bf16.msra.mxu0 0
    %172 = vmatprep.subr.bf16.mxu0 0
    %173 = vmatpush1.bf16.msra.mxu0 0
    %174 = vmatprep.subr.bf16.mxu0 0
    %175 = vmatpush1.bf16.msra.mxu0 0
    %176 = vmatprep.subr.bf16.mxu0 0
    %177 = vmatpush1.bf16.msra.mxu0 0
    %178 = vmatprep.subr.bf16.mxu0 0
    %179 = vmatpush1.bf16.msra.mxu0 0
    %180 = vmatprep.subr.bf16.mxu0 0
    %181 = vmatpush1.bf16.msra.mxu0 0
    %182 = vmatprep.subr.bf16.mxu0 0
    %183 = vmatpush1.bf16.msra.mxu0 0
    %184 = vmatprep.subr.bf16.mxu0 0
    %185 = vmatpush1.bf16.msra.mxu0 0
    %186 = vmatprep.subr.bf16.mxu0 0
    %187 = vmatpush1.bf16.msra.mxu0 0
    %188 = vmatprep.subr.bf16.mxu0 0
    %189 = vmatpush1.bf16.msra.mxu0 0
    %190 = vmatprep.mubr.bf16.mxu0 0
    %191 = vmatmul.mubr.bf16.gmra.mrb[0].mxu0 %v156
    %v192 = vpop.f32.mrb[0].mxu0
    %v193 = vadd.f32 0.0, %v192
    %v194 = vpop.f32.mrb[0].mxu0
    %v195 = vpop.f32.mrb[0].mxu0
    %v196 = vadd.f32 0.0, %v195
    %v197 = vpop.f32.mrb[0].mxu0
    %198 = vdwg.mxu0
    %vm199 = vcmask 31744
    %v200 = vsel %vm199, %v193, -inf
    %v201 = vrot.slane %v200, 4
    %v202 = vmax.f32 %v200, %v201
    %v203 = vrot.slane %v202, 2
    %v204 = vmax.f32 %v202, %v203
    %v205 = vrot.slane %v204, 1
    %v206 = vmax.f32 %v204, %v205
    %v207 = vsel %vm199, %v196, -inf
    %v208 = vrot.slane %v207, 4
    %v209 = vmax.f32 %v207, %v208
    %v210 = vrot.slane %v209, 2
    %v211 = vmax.f32 %v209, %v210
    %v212 = vrot.slane %v211, 1
    %v213 = vmax.f32 %v211, %v212
    %v214 = vsub.f32 %v193, %v206
    %v215 = vsub.f32 %v196, %v213
    %v216 = vmul.f32 %v214, 1.442695
    %v217 = vpow.pop %v216
    %v218 = vmul.f32 %v215, 1.442695
    %v219 = vpow.pop %v218
    %v220 = vsel %vm199, %v217, 0.0
    %v221 = vrot.slane %v220, 4
    %v222 = vadd.f32 %v220, %v221
    %v223 = vrot.slane %v222, 2
    %v224 = vadd.f32 %v222, %v223
    %v225 = vrot.slane %v224, 1
    %v226 = vadd.f32 %v224, %v225
    %v227 = vsel %vm199, %v219, 0.0
    %v228 = vrot.slane %v227, 4
    %v229 = vadd.f32 %v227, %v228
    %v230 = vrot.slane %v229, 2
    %v231 = vadd.f32 %v229, %v230
    %v232 = vrot.slane %v231, 1
    %v233 = vadd.f32 %v231, %v232
    %v234 = vrcp.pop %v226
    %v235 = vrcp.pop %v233
    %v236 = vmul.f32 %v217, %v234
    %v237 = vmul.f32 %v219, %v235
    %238 = vxpose.xlu0.b32.start [1/16] %v236, 128
    %239 = vxpose.xlu0.b32.cont [2/16] 0.0, 128
    %240 = vxpose.xlu0.b32.cont [3/16] 0.0, 128
    %241 = vxpose.xlu0.b32.cont [4/16] 0.0, 128
    %242 = vxpose.xlu0.b32.cont [5/16] 0.0, 128
    %243 = vxpose.xlu0.b32.cont [6/16] 0.0, 128
    %244 = vxpose.xlu0.b32.cont [7/16] 0.0, 128
    %245 = vxpose.xlu0.b32.cont [8/16] 0.0, 128
    %246 = vxpose.xlu0.b32.cont [9/16] 0.0, 128
    %247 = vxpose.xlu0.b32.cont [10/16] 0.0, 128
    %248 = vxpose.xlu0.b32.cont [11/16] 0.0, 128
    %249 = vxpose.xlu0.b32.cont [12/16] 0.0, 128
    %250 = vxpose.xlu0.b32.cont [13/16] 0.0, 128
    %251 = vxpose.xlu0.b32.cont [14/16] 0.0, 128
    %252 = vxpose.xlu0.b32.cont [15/16] 0.0, 128
    %253 = vxpose.xlu0.b32.end [16/16] 0.0, 128
    %v254 = vpop.trf.xlu0
    %v255 = vpop.trf.xlu0
    %v256 = vpop.trf.xlu0
    %v257 = vpop.trf.xlu0
    %v258 = vpop.trf.xlu0
    %v259 = vpop.trf.xlu0
    %v260 = vpop.trf.xlu0
    %v261 = vpop.trf.xlu0
    %v262 = vpop.trf.xlu0
    %v263 = vpop.trf.xlu0
    %v264 = vpop.trf.xlu0
    %v265 = vpop.trf.xlu0
    %v266 = vpop.trf.xlu0
    %v267 = vpop.trf.xlu0
    %v268 = vpop.trf.xlu0
    %v269 = vpop.trf.xlu0
    %270 = vxpose.xlu0.b32.start [1/16] %v237, 128
    %271 = vxpose.xlu0.b32.cont [2/16] 0.0, 128
    %272 = vxpose.xlu0.b32.cont [3/16] 0.0, 128
    %273 = vxpose.xlu0.b32.cont [4/16] 0.0, 128
    %274 = vxpose.xlu0.b32.cont [5/16] 0.0, 128
    %275 = vxpose.xlu0.b32.cont [6/16] 0.0, 128
    %276 = vxpose.xlu0.b32.cont [7/16] 0.0, 128
    %277 = vxpose.xlu0.b32.cont [8/16] 0.0, 128
    %278 = vxpose.xlu0.b32.cont [9/16] 0.0, 128
    %279 = vxpose.xlu0.b32.cont [10/16] 0.0, 128
    %280 = vxpose.xlu0.b32.cont [11/16] 0.0, 128
    %281 = vxpose.xlu0.b32.cont [12/16] 0.0, 128
    %282 = vxpose.xlu0.b32.cont [13/16] 0.0, 128
    %283 = vxpose.xlu0.b32.cont [14/16] 0.0, 128
    %284 = vxpose.xlu0.b32.cont [15/16] 0.0, 128
    %285 = vxpose.xlu0.b32.end [16/16] 0.0, 128
    %v286 = vpop.trf.xlu0
    %v287 = vpop.trf.xlu0
    %v288 = vpop.trf.xlu0
    %v289 = vpop.trf.xlu0
    %v290 = vpop.trf.xlu0
    %v291 = vpop.trf.xlu0
    %v292 = vpop.trf.xlu0
    %v293 = vpop.trf.xlu0
    %v294 = vpop.trf.xlu0
    %v295 = vpop.trf.xlu0
    %v296 = vpop.trf.xlu0
    %v297 = vpop.trf.xlu0
    %v298 = vpop.trf.xlu0
    %v299 = vpop.trf.xlu0
    %v300 = vpop.trf.xlu0
    %v301 = vpop.trf.xlu0
    %vm302 = vcmask 60416
    %303 = vst.msk [vmem:[#allocation10] sm:$0xf] %vm302, %v254
    %304 = vst.msk [vmem:[#allocation10 + $0x4] sm:$0xf] %vm302, %v286
    // Predicated region
    $region34: #{tpu_custom_call.1} parent=1 // pred_check
      _
    $region35: #{tpu_custom_call.1} parent=1 // pred_check_branch
      %306 = sbr.rel (0) target = $region37
    $region36: #{tpu_custom_call.1} parent=1 // pred_region
      %s308 = ssub.s32 128, 128
      %309 = vsyncadd [#allocation4], %s308
      %s310 = sshll.u32 [#allocation10], 4
      %s311 = int_to_ptr.vmem [resolvable:$true] %s310
      %316 = dma.vmem_to_hbm [thread:$0]  %s311, 128, %s4, [#allocation4], 64, 64, 4
    $region37: #{tpu_custom_call.1} parent=1 // pred_fallthru
      _
    // Predicated region
    $region38: #{tpu_custom_call.1} parent=1 // pred_check
      _
    $region39: #{tpu_custom_call.1} parent=1 // pred_check_branch
      %318 = sbr.rel (0) target = $region41
    $region40: #{tpu_custom_call.1} parent=1 // pred_region
      %319 = dma.done [#allocation4], 128
    $region41: #{tpu_custom_call.1} parent=1 // pred_fallthru
      _
    %320 = vsyncpa [#allocation3], 1
    %321 = vsyncpa [#allocation6], 1
    %322 = vsyncpa [#allocation9], 1
    %323 = vsyncpa [#allocation4], 1

// kernel: tpu_custom_call.1
$region0: #{tpu_custom_call.1}
  #allocation0 [shape = 'u32[]', space=smem, size = 0x4, offset = 0x4, fixed_abs, tag = 'smem constant byte address 0x4 - core index']
  #allocation1 [shape = 'u32[144,128]{1,0:T(1,128)}', space=vmem, size = 0x12000, scoped, tag = 'internal scratch']
  %s0 = inlined_call_operand.hbm [shape: f32[2,8,32], index: 0, kind: input, shape index: {}]
  %s1 = inlined_call_operand.hbm [shape: bf16[32,16], index: 1, kind: input, shape index: {}]
  %s2 = inlined_call_operand.hbm [shape: f32[1,16], index: 2, kind: input, shape index: {}]
  %s3 = inlined_call_operand.hbm [shape: bf16[16,4], index: 3, kind: input, shape index: {}]
  %s4 = inlined_call_operand.hbm [shape: f32[2,8,4], index: 4, kind: output, shape index: {}]
  %s5 = sld [smem:[#allocation0]]
  $region42: #{tpu_custom_call.1} parent=0
    _
  %s7 = ssub.s32 1, %s5
  %s8 = scalar_select 0, %s7, %s5
  $region1: #{tpu_custom_call.1} parent=0
    #allocation2 [shape = 'u8[8192]{0}', space=vmem, size = 0x2000, scoped, tag = 'input window, operand 0, single buffered']
    #allocation3 [shape = 's32[1]{0}', space=sflag, size = 0x4, scoped, tag = 'scoped memory for tpu_custom_call.1']
    #allocation4 [shape = 's32[1]{0}', space=sflag, size = 0x4, scoped, tag = 'scoped memory for tpu_custom_call.1']
    #allocation5 [shape = 'u8[8192]{0}', space=vmem, size = 0x2000, scoped, tag = 'input window, operand 1, single buffered']
    #allocation6 [shape = 's32[1]{0}', space=sflag, size = 0x4, scoped, tag = 'scoped memory for tpu_custom_call.1']
    #allocation7 [shape = 'u8[512]{0}', space=vmem, size = 0x400, scoped, tag = 'input window, operand 2, single buffered']
    #allocation8 [shape = 'u8[4096]{0}', space=vmem, size = 0x1000, scoped, tag = 'input window, operand 3, single buffered']
    #allocation9 [shape = 's32[1]{0}', space=sflag, size = 0x4, scoped, tag = 'scoped memory for tpu_custom_call.1']
    #allocation10 [shape = 'u8[8192]{0}', space=vmem, size = 0x2000, scoped, tag = 'output window, operand 0, single buffered']
    %9 = vsyncpa [#allocation3], 0
    %10 = vsyncpa [#allocation6], 0
    %11 = vsyncpa [#allocation9], 0
    %12 = vsyncpa [#allocation4], 0
    // Predicated region
    $region2: #{tpu_custom_call.1} parent=1 // pred_check
      _
    $region3: #{tpu_custom_call.1} parent=1 // pred_check_branch
      %14 = sbr.rel (0) target = $region5
    $region4: #{tpu_custom_call.1} parent=1 // pred_region
      %s16 = ssub.s32 256, 256
      %17 = vsyncadd [#allocation3], %s16
      %s18 = sshll.u32 [#allocation2], 4
      %s19 = int_to_ptr.vmem [resolvable:$true] %s18
      %24 = dma.hbm_to_vmem [thread:$0]  %s0, 256, %s19, [#allocation3], 128, 128, 8
    $region5: #{tpu_custom_call.1} parent=1 // pred_fallthru
      _
    // Predicated region
    $region6: #{tpu_custom_call.1} parent=1 // pred_check
      _
    $region7: #{tpu_custom_call.1} parent=1 // pred_check_branch
      %26 = sbr.rel (0) target = $region9
    $region8: #{tpu_custom_call.1} parent=1 // pred_region
      %s28 = ssub.s32 256, 256
      %29 = vsyncadd [#allocation6], %s28
      %s30 = sshll.u32 [#allocation5], 4
      %s31 = int_to_ptr.vmem [resolvable:$true] %s30
      %36 = dma.hbm_to_vmem [thread:$0]  %s1, 256, %s31, [#allocation6], 64, 64, 4
    $region9: #{tpu_custom_call.1} parent=1 // pred_fallthru
      _
    // Predicated region
    $region10: #{tpu_custom_call.1} parent=1 // pred_check
      _
    $region11: #{tpu_custom_call.1} parent=1 // pred_check_branch
      %38 = sbr.rel (0) target = $region13
    $region12: #{tpu_custom_call.1} parent=1 // pred_region
      %s40 = ssub.s32 16, 16
      %41 = vsyncadd [#allocation6], %s40
      %s43 = sshll.u32 [#allocation7], 4
      %s44 = int_to_ptr.vmem [resolvable:$true] %s43
      %46 = dma.hbm_to_vmem [thread:$0]  %s2, 16, %s44, [#allocation6]
    $region13: #{tpu_custom_call.1} parent=1 // pred_fallthru
      _
    // Predicated region
    $region14: #{tpu_custom_call.1} parent=1 // pred_check
      _
    $region15: #{tpu_custom_call.1} parent=1 // pred_check_branch
      %48 = sbr.rel (0) target = $region17
    $region16: #{tpu_custom_call.1} parent=1 // pred_region
      %s50 = ssub.s32 128, 128
      %51 = vsyncadd [#allocation9], %s50
      %s52 = sshll.u32 [#allocation8], 4
      %s53 = int_to_ptr.vmem [resolvable:$true] %s52
      %58 = dma.hbm_to_vmem [thread:$0]  %s3, 128, %s53, [#allocation9], 64, 64, 4
    $region17: #{tpu_custom_call.1} parent=1 // pred_fallthru
      _
    // Predicated region
    $region18: #{tpu_custom_call.1} parent=1 // pred_check
      _
    $region19: #{tpu_custom_call.1} parent=1 // pred_check_branch
      %60 = sbr.rel (0) target = $region21
    $region20: #{tpu_custom_call.1} parent=1 // pred_region
      %61 = dma.done [#allocation3], 256
    $region21: #{tpu_custom_call.1} parent=1 // pred_fallthru
      _
    // Predicated region
    $region22: #{tpu_custom_call.1} parent=1 // pred_check
      _
    $region23: #{tpu_custom_call.1} parent=1 // pred_check_branch
      %63 = sbr.rel (0) target = $region25
    $region24: #{tpu_custom_call.1} parent=1 // pred_region
      %64 = dma.done [#allocation6], 256
    $region25: #{tpu_custom_call.1} parent=1 // pred_fallthru
      _
    // Predicated region
    $region26: #{tpu_custom_call.1} parent=1 // pred_check
      _
    $region27: #{tpu_custom_call.1} parent=1 // pred_check_branch
      %66 = sbr.rel (0) target = $region29
    $region28: #{tpu_custom_call.1} parent=1 // pred_region
      %67 = dma.done [#allocation6], 16
    $region29: #{tpu_custom_call.1} parent=1 // pred_fallthru
      _
    // Predicated region
    $region30: #{tpu_custom_call.1} parent=1 // pred_check
      _
    $region31: #{tpu_custom_call.1} parent=1 // pred_check_branch
      %69 = sbr.rel (0) target = $region33
    $region32: #{tpu_custom_call.1} parent=1 // pred_region
      %70 = dma.done [#allocation9], 128
    $region33: #{tpu_custom_call.1} parent=1 // pred_fallthru
      _
    %v72 = vld [vmem:[#allocation2] sm:$0xff]
    %v73 = vld [vmem:[#allocation2 + $0x8] sm:$0xff]
    %v74 = vpack.c.bf16 %v73, %v72
    %v75 = vld [vmem:[#allocation5] sm:$0xf]
    %v76 = vld [vmem:[#allocation5 + $0x4] sm:$0xf]
    %v77 = vld [vmem:[#allocation5 + $0x8] sm:$0xf]
    %v78 = vld [vmem:[#allocation5 + $0xc] sm:$0xf]
    %v79 = vld [vmem:[#allocation7] sm:$0x1]
    %v81 = vlaneseq
    %v82 = vshrl.u32 %v81, 7
    %v83 = vsub.s32 0, %v82
    %v84 = vrot.slane %v79, %v83
    %v90 = vunpack.c.l.b16 %v75
    %v91 = vunpack.c.l.b16 %v76
    %v92 = vunpack.c.l.b16 %v77
    %v93 = vunpack.c.l.b16 %v78
    %v94 = vpack.c.b16 %v91, %v90
    %v95 = vpack.c.b16 %v93, %v92
    %vm98 = vcmask 261120
    %v100 = vsel %vm98, %v74, 0
    %102 = vmatprep.subr.bf16.mxu0 0
    %103 = vmatpush1.bf16.msra.mxu0 %v94
    %104 = vmatprep.subr.bf16.mxu0 0
    %105 = vmatpush1.bf16.msra.mxu0 %v95
    %106 = vmatprep.subr.bf16.mxu0 0
    %107 = vmatpush1.bf16.msra.mxu0 0
    %108 = vmatprep.subr.bf16.mxu0 0
    %109 = vmatpush1.bf16.msra.mxu0 0
    %110 = vmatprep.subr.bf16.mxu0 0
    %111 = vmatpush1.bf16.msra.mxu0 0
    %112 = vmatprep.subr.bf16.mxu0 0
    %113 = vmatpush1.bf16.msra.mxu0 0
    %114 = vmatprep.subr.bf16.mxu0 0
    %115 = vmatpush1.bf16.msra.mxu0 0
    %116 = vmatprep.subr.bf16.mxu0 0
    %117 = vmatpush1.bf16.msra.mxu0 0
    %118 = vmatprep.subr.bf16.mxu0 0
    %119 = vmatpush1.bf16.msra.mxu0 0
    %120 = vmatprep.subr.bf16.mxu0 0
    %121 = vmatpush1.bf16.msra.mxu0 0
    %122 = vmatprep.subr.bf16.mxu0 0
    %123 = vmatpush1.bf16.msra.mxu0 0
    %124 = vmatprep.subr.bf16.mxu0 0
    %125 = vmatpush1.bf16.msra.mxu0 0
    %126 = vmatprep.subr.bf16.mxu0 0
    %127 = vmatpush1.bf16.msra.mxu0 0
    %128 = vmatprep.subr.bf16.mxu0 0
    %129 = vmatpush1.bf16.msra.mxu0 0
    %130 = vmatprep.subr.bf16.mxu0 0
    %131 = vmatpush1.bf16.msra.mxu0 0
    %132 = vmatprep.subr.bf16.mxu0 0
    %133 = vmatpush1.bf16.msra.mxu0 0
    %134 = vmatprep.mubr.bf16.mxu0 0
    %135 = vmatmul.mubr.bf16.gmra.mrb[0].mxu0 %v100
    %v136 = vpop.f32.mrb[0].mxu0
    %v137 = vadd.f32 %v84, %v136
    %v138 = vpop.f32.mrb[0].mxu0
    %v139 = vpop.f32.mrb[0].mxu0
    %v140 = vadd.f32 %v84, %v139
    %v141 = vpop.f32.mrb[0].mxu0
    %142 = vdwg.mxu0
    %v143 = vtanh.pop %v137
    %v144 = vtanh.pop %v140
    %v145 = vpack.c.bf16 %v144, %v143
    %v146 = vld [vmem:[#allocation8] sm:$0xf]
    %v147 = vld [vmem:[#allocation8 + $0x4] sm:$0xf]
    %v150 = vunpack.c.l.b16 %v146
    %v151 = vunpack.c.l.b16 %v147
    %v152 = vpack.c.b16 %v151, %v150
    %vm154 = vcmask 130048
    %v156 = vsel %vm154, %v145, 0
    %158 = vmatprep.subr.bf16.mxu0 0
    %159 = vmatpush1.bf16.msra.mxu0 %v152
    %160 = vmatprep.subr.bf16.mxu0 0
    %161 = vmatpush1.bf16.msra.mxu0 0
    %162 = vmatprep.subr.bf16.mxu0 0
    %163 = vmatpush1.bf16.msra.mxu0 0
    %164 = vmatprep.subr.bf16.mxu0 0
    %165 = vmatpush1.bf16.msra.mxu0 0
    %166 = vmatprep.subr.bf16.mxu0 0
    %167 = vmatpush1.bf16.msra.mxu0 0
    %168 = vmatprep.subr.bf16.mxu0 0
    %169 = vmatpush1.bf16.msra.mxu0 0
    %170 = vmatprep.subr.bf16.mxu0 0
    %171 = vmatpush1.bf16.msra.mxu0 0
    %172 = vmatprep.subr.bf16.mxu0 0
    %173 = vmatpush1.bf16.msra.mxu0 0
    %174 = vmatprep.subr.bf16.mxu0 0
    %175 = vmatpush1.bf16.msra.mxu0 0
    %176 = vmatprep.subr.bf16.mxu0 0
    %177 = vmatpush1.bf16.msra.mxu0 0
    %178 = vmatprep.subr.bf16.mxu0 0
    %179 = vmatpush1.bf16.msra.mxu0 0
    %180 = vmatprep.subr.bf16.mxu0 0
    %181 = vmatpush1.bf16.msra.mxu0 0
    %182 = vmatprep.subr.bf16.mxu0 0
    %183 = vmatpush1.bf16.msra.mxu0 0
    %184 = vmatprep.subr.bf16.mxu0 0
    %185 = vmatpush1.bf16.msra.mxu0 0
    %186 = vmatprep.subr.bf16.mxu0 0
    %187 = vmatpush1.bf16.msra.mxu0 0
    %188 = vmatprep.subr.bf16.mxu0 0
    %189 = vmatpush1.bf16.msra.mxu0 0
    %190 = vmatprep.mubr.bf16.mxu0 0
    %191 = vmatmul.mubr.bf16.gmra.mrb[0].mxu0 %v156
    %v192 = vpop.f32.mrb[0].mxu0
    %v193 = vadd.f32 0.0, %v192
    %v194 = vpop.f32.mrb[0].mxu0
    %v195 = vpop.f32.mrb[0].mxu0
    %v196 = vadd.f32 0.0, %v195
    %v197 = vpop.f32.mrb[0].mxu0
    %198 = vdwg.mxu0
    %vm199 = vcmask 31744
    %v200 = vsel %vm199, %v193, -inf
    %v201 = vrot.slane %v200, 4
    %v202 = vmax.f32 %v200, %v201
    %v203 = vrot.slane %v202, 2
    %v204 = vmax.f32 %v202, %v203
    %v205 = vrot.slane %v204, 1
    %v206 = vmax.f32 %v204, %v205
    %v207 = vsel %vm199, %v196, -inf
    %v208 = vrot.slane %v207, 4
    %v209 = vmax.f32 %v207, %v208
    %v210 = vrot.slane %v209, 2
    %v211 = vmax.f32 %v209, %v210
    %v212 = vrot.slane %v211, 1
    %v213 = vmax.f32 %v211, %v212
    %v214 = vsub.f32 %v193, %v206
    %v215 = vsub.f32 %v196, %v213
    %v216 = vmul.f32 %v214, 1.442695
    %v217 = vpow.pop %v216
    %v218 = vmul.f32 %v215, 1.442695
    %v219 = vpow.pop %v218
    %v220 = vsel %vm199, %v217, 0.0
    %v221 = vrot.slane %v220, 4
    %v222 = vadd.f32 %v220, %v221
    %v223 = vrot.slane %v222, 2
    %v224 = vadd.f32 %v222, %v223
    %v225 = vrot.slane %v224, 1
    %v226 = vadd.f32 %v224, %v225
    %v227 = vsel %vm199, %v219, 0.0
    %v228 = vrot.slane %v227, 4
    %v229 = vadd.f32 %v227, %v228
    %v230 = vrot.slane %v229, 2
    %v231 = vadd.f32 %v229, %v230
    %v232 = vrot.slane %v231, 1
    %v233 = vadd.f32 %v231, %v232
    %v234 = vrcp.pop %v226
    %v235 = vrcp.pop %v233
    %v236 = vmul.f32 %v217, %v234
    %v237 = vmul.f32 %v219, %v235
    %238 = vst.msk [vmem:[#allocation10] sm:$0xff] %vm199, %v236
    %239 = vst.msk [vmem:[#allocation10 + $0x8] sm:$0xff] %vm199, %v237
    // Predicated region
    $region34: #{tpu_custom_call.1} parent=1 // pred_check
      _
    $region35: #{tpu_custom_call.1} parent=1 // pred_check_branch
      %241 = sbr.rel (0) target = $region37
    $region36: #{tpu_custom_call.1} parent=1 // pred_region
      %s243 = ssub.s32 256, 256
      %244 = vsyncadd [#allocation4], %s243
      %s245 = sshll.u32 [#allocation10], 4
      %s246 = int_to_ptr.vmem [resolvable:$true] %s245
      %251 = dma.vmem_to_hbm [thread:$0]  %s246, 256, %s4, [#allocation4], 128, 128, 8
    $region37: #{tpu_custom_call.1} parent=1 // pred_fallthru
      _
    // Predicated region
    $region38: #{tpu_custom_call.1} parent=1 // pred_check
      _
    $region39: #{tpu_custom_call.1} parent=1 // pred_check_branch
      %253 = sbr.rel (0) target = $region41
    $region40: #{tpu_custom_call.1} parent=1 // pred_region
      %254 = dma.done [#allocation4], 256
    $region41: #{tpu_custom_call.1} parent=1 // pred_fallthru
      _
    %255 = vsyncpa [#allocation3], 1
    %256 = vsyncpa [#allocation6], 1
    %257 = vsyncpa [#allocation9], 1
    %258 = vsyncpa [#allocation4], 1

</llo_original>
